<compile_context>
chip_gen: v5e
topology: v5e:2x2
jax: 0.10.0
libtpu: 0.0.40
codegen_flags: <defaults>
</compile_context>

<pallas_src>
import jax
import jax.numpy as jnp
from jax.experimental import pallas as pl
from jax.experimental.pallas import tpu as pltpu


def _identity_copy_kernel(x_ref, o_ref):
    # Elementwise identity: straight VMEM copy of the current tile.
    o_ref[...] = x_ref[...]


_LANE = 128
_TILE_BYTES = 4 << 20     # ~4 MiB per tile (review target for v7x/v6e)
_VMEM_LIMIT = 32 << 20    # in+out double-buffered = 4*tile = 16 MiB << 32 MiB


def _choose_layout(x):
    """Pick a lane-dense (rows, cols) view, tile shape, grid and tiled axis."""
    n = x.size
    itemsize = jnp.dtype(x.dtype).itemsize
    # Sub-32-bit dtypes pack along sublanes: f32 -> 8, bf16 -> 16, int8 -> 32.
    pack = 8 * (4 // itemsize)
    tile_elems = max(_LANE * pack, _TILE_BYTES // itemsize)

    # Lane-dense column count (multiple of 128) that divides n exactly.
    cols = None
    for c in (1024, 512, 256, 128):
        if n % c == 0:
            cols = c
            break

    if cols is not None:
        rows = n // cols
        tm_target = max(pack, (tile_elems // cols) // pack * pack)
        if rows <= tm_target:
            tm = rows                  # single block == full array dims
        else:
            tm = tm_target             # cdiv grid; ragged last tile is masked
        return (rows, cols), (tm, cols), (pl.cdiv(rows, tm),), 0

    # Total size not a multiple of 128: one logical row, tile along the lane
    # axis with a cdiv grid (never a full-array VMEM block).
    rows, cols = 1, n
    tn_target = max(_LANE, (tile_elems // _LANE) * _LANE)
    tn = cols if cols <= tn_target else tn_target
    return (rows, cols), (1, tn), (pl.cdiv(cols, tn),), 1


def softmax_module_forward(x, *, run_pallas=True):
    """Pallas forward for MMEngine's `Softmax` module: identity (`return x`)."""
    print("call Softmax.forward")  # mirror the reference forward's side effect

    if x.size == 0 or not run_pallas:
        # Production fast path (perf review #1): the op is identity, so the
        # only change that beats the HBM roofline is to skip the copy.
        return x

    orig_shape = x.shape
    (rows, cols), (tm, tn), grid, tiled_axis = _choose_layout(x)
    x2 = x.reshape(rows, cols)

    if tiled_axis == 0:
        index_map = lambda i: (i, 0)   # tile over rows (sublane axis)
    else:
        index_map = lambda i: (0, i)   # tile over cols (lane axis)

    out = pl.pallas_call(
        _identity_copy_kernel,
        out_shape=jax.ShapeDtypeStruct((rows, cols), x2.dtype),
        grid=grid,
        in_specs=[pl.BlockSpec((tm, tn), index_map)],
        out_specs=pl.BlockSpec((tm, tn), index_map),
        compiler_params=pltpu.CompilerParams(
            dimension_semantics=("parallel",),   # shards grid on v7x's 2 TCs
            vmem_limit_bytes=_VMEM_LIMIT,
        ),
        cost_estimate=pl.CostEstimate(
            flops=0, transcendentals=0, bytes_accessed=2 * x.nbytes
        ),
    )(x2)

    return out.reshape(orig_shape)


if __name__ == "__main__":
    key = jax.random.PRNGKey(0)
    # Small NCHW activation consistent with the module.
    x = jax.random.normal(key, (2, 4, 16, 16), dtype=jnp.float32)

    y = softmax_module_forward(x)          # exercises the Pallas path
    y = jax.block_until_ready(y)

    # Forward semantics check: identity.
    assert y.shape == x.shape and y.dtype == x.dtype
    assert bool(jnp.all(y == x))

    print("KERNEL_OK")
</pallas_src>

<mosaic_0001>
module attributes {stable_mosaic.version = 11 : i64} {
  func.func @_identity_copy_kernel(%arg0: i32, %arg1: memref<2x1024xf32, #tpu.memory_space<vmem>>, %arg2: memref<2x1024xf32, #tpu.memory_space<vmem>>) attributes {dimension_semantics = [#tpu.dimension_semantics<parallel>], iteration_bounds = array<i64: 1>, scalar_prefetch = 0 : i64, scratch_operands = 0 : i64, tpu.core_type = #tpu.core_type<tc>, window_params = [{transform_indices = @transform_0, window_bounds = array<i64: 2, 1024>}, {transform_indices = @transform_1, window_bounds = array<i64: 2, 1024>}]} {
    %c0 = arith.constant 0 : index
    %c0_0 = arith.constant 0 : index
    %0 = vector.load %arg1[%c0, %c0_0] : memref<2x1024xf32, #tpu.memory_space<vmem>>, vector<2x1024xf32>
    %c0_1 = arith.constant 0 : index
    %c0_2 = arith.constant 0 : index
    %1 = vector.load %arg2[%c0_1, %c0_2] : memref<2x1024xf32, #tpu.memory_space<vmem>>, vector<2x1024xf32>
    tpu.vector_store %arg2[%c0_1, %c0_2], %0 {strides = array<i32>} : memref<2x1024xf32, #tpu.memory_space<vmem>>, vector<2x1024xf32>,
    return
  }
  func.func @transform_0(%arg0: i32) -> (i32, i32) {
    %c0_i32 = arith.constant 0 : i32
    %c0_i32_0 = arith.constant 0 : i32
    return %arg0, %c0_i32 : i32, i32
  }
  func.func @transform_1(%arg0: i32) -> (i32, i32) {
    %c0_i32 = arith.constant 0 : i32
    %c0_i32_0 = arith.constant 0 : i32
    return %arg0, %c0_i32 : i32, i32
  }
}

</mosaic_0001>

<llo_original>
// kernel: tpu_custom_call.1
$region0: #{tpu_custom_call.1}
  #allocation0 [shape = 'u32[]', space=smem, size = 0x4, offset = 0x4, fixed_abs, tag = 'smem constant byte address 0x4 - core index']
  #allocation1 [shape = 'u32[72,128]{1,0:T(1,128)}', space=vmem, size = 0x9000, scoped, tag = 'internal scratch']
  %s0 = inlined_call_operand.hbm [shape: f32[2,1024], index: 0, kind: input, shape index: {}]
  %s1 = inlined_call_operand.hbm [shape: f32[2,1024], index: 1, kind: output, shape index: {}]
  %s2 = sld [smem:[#allocation0]]
  $region18: #{tpu_custom_call.1} parent=0
    _
  %s4 = ssub.s32 1, %s2
  %s5 = scalar_select 0, %s4, %s2
  $region1: #{tpu_custom_call.1} parent=0
    #allocation2 [shape = 'u8[8192]{0}', space=vmem, size = 0x2000, scoped, tag = 'input window, operand 0, single buffered']
    #allocation3 [shape = 's32[1]{0}', space=sflag, size = 0x4, scoped, tag = 'scoped memory for tpu_custom_call.1']
    #allocation4 [shape = 's32[1]{0}', space=sflag, size = 0x4, scoped, tag = 'scoped memory for tpu_custom_call.1']
    #allocation5 [shape = 'u8[8192]{0}', space=vmem, size = 0x2000, scoped, tag = 'output window, operand 0, single buffered']
    %6 = vsyncpa [#allocation3], 0
    %7 = vsyncpa [#allocation4], 0
    // Predicated region
    $region2: #{tpu_custom_call.1} parent=1 // pred_check
      _
    $region3: #{tpu_custom_call.1} parent=1 // pred_check_branch
      %9 = sbr.rel (0) target = $region5
    $region4: #{tpu_custom_call.1} parent=1 // pred_region
      %11 = vsyncadd [#allocation3], 0
      %s13 = sshll.u32 %s0, 4
      %s14 = int_to_ptr.hbm [resolvable:$true] %s13
      %s15 = sshll.u32 [#allocation2], 4
      %s16 = int_to_ptr.vmem [resolvable:$true] %s15
      %18 = dma.hbm_to_vmem [thread:$0]  %s14, 256, %s16, [#allocation3]
    $region5: #{tpu_custom_call.1} parent=1 // pred_fallthru
      _
    // Predicated region
    $region6: #{tpu_custom_call.1} parent=1 // pred_check
      _
    $region7: #{tpu_custom_call.1} parent=1 // pred_check_branch
      %20 = sbr.rel (0) target = $region9
    $region8: #{tpu_custom_call.1} parent=1 // pred_region
      %22 = dma.done [#allocation3], 256
    $region9: #{tpu_custom_call.1} parent=1 // pred_fallthru
      _
    %v23 = vld [vmem:[#allocation2] sm:$0xff]
    %v24 = vld [vmem:[#allocation2 + $0x8] sm:$0xff]
    %25 = vst [vmem:[#allocation5] sm:$0xff] %v23
    %26 = vst [vmem:[#allocation5 + $0x8] sm:$0xff] %v24
    // Predicated region
    $region10: #{tpu_custom_call.1} parent=1 // pred_check
      _
    $region11: #{tpu_custom_call.1} parent=1 // pred_check_branch
      %28 = sbr.rel (0) target = $region13
    $region12: #{tpu_custom_call.1} parent=1 // pred_region
      %30 = vsyncadd [#allocation4], 0
      %s32 = sshll.u32 [#allocation5], 4
      %s33 = int_to_ptr.vmem [resolvable:$true] %s32
      %s34 = sshll.u32 %s1, 4
      %s35 = int_to_ptr.hbm [resolvable:$true] %s34
      %37 = dma.vmem_to_hbm [thread:$0]  %s33, 256, %s35, [#allocation4]
    $region13: #{tpu_custom_call.1} parent=1 // pred_fallthru
      _
    // Predicated region
    $region14: #{tpu_custom_call.1} parent=1 // pred_check
      _
    $region15: #{tpu_custom_call.1} parent=1 // pred_check_branch
      %39 = sbr.rel (0) target = $region17
    $region16: #{tpu_custom_call.1} parent=1 // pred_region
      %41 = dma.done [#allocation4], 256
    $region17: #{tpu_custom_call.1} parent=1 // pred_fallthru
      _
    %42 = vsyncpa [#allocation3], 1
    %43 = vsyncpa [#allocation4], 1

</llo_original>
